<compile_context>
chip_gen: v5e
topology: v5e:2x2
jax: 0.10.0
libtpu: 0.0.40
codegen_flags: <defaults>
</compile_context>

<pallas_src>
import functools
import math

import jax
import jax.numpy as jnp
from jax.experimental import pallas as pl
from jax.experimental.pallas import tpu as pltpu


_MIN_TILE_BYTES = 1 << 20   # keep >= ~1 MiB of input per grid step (roofline plateau)
_TARGET_STEPS = 8           # enough steps for steady-state pipelining + 2-TC sharding


def _normalize_kernel(x_ref, o_ref, *, power, axis: int):
    x = x_ref[...]
    xf = x if x.dtype == jnp.float32 else x.astype(jnp.float32)
    # NOTE: matches the PyTorch module exactly (x**p, no abs, no eps); all-zero
    # rows therefore give inf/NaN just like the reference module.
    s = jnp.sum(xf ** power, axis=axis, keepdims=True)        # XLU cross-lane/sublane reduce
    if power == 2:
        inv = jax.lax.rsqrt(s)                                 # EUP rsqrt (own VLIW slot)
    else:
        inv = s ** (-1.0 / power)                              # EUP pow, once per row
    if x.dtype == jnp.float32:
        o_ref[...] = xf * inv                                  # multiply-by-reciprocal, no divide
    else:
        # Multiply in the narrow dtype: avoids a second full-tile f32 temporary.
        o_ref[...] = (x * inv.astype(x.dtype)).astype(o_ref.dtype)


def _vmem_budget():
    """Returns (per-tile byte budget, scoped-vmem limit to request, physical cap)."""
    cap = 64 * 1024 * 1024                      # conservative default (v7x per-TC)
    try:
        info = pltpu.get_tpu_info()
        cap = int(getattr(info, "vmem_capacity_bytes", cap)) or cap
    except Exception:
        pass
    limit = min(cap // 2, 64 * 1024 * 1024)     # 64 MiB on v5e/v6e, 32 MiB on v7x
    budget = limit // 2                         # tile footprint target, leaves headroom
    return budget, limit, cap


def _rows_for_lane_reduce(n, d, itemsize, budget):
    """Row-tile size when the normalized axis is the trailing (lane) axis."""
    bytes_per_elem = 4 * itemsize + 8           # 2x in + 2x out pipeline bufs + f32 temps
    bytes_per_row = max(1, d * bytes_per_elem)
    rows_budget = max(8, budget // bytes_per_row)
    # Cap so non-trivial inputs get a multi-step grid, without shrinking a step
    # below ~1 MiB of input data.
    floor_rows = max(8, _MIN_TILE_BYTES // max(1, d * itemsize))
    rows = min(rows_budget, max(floor_rows, pl.cdiv(n, _TARGET_STEPS)))
    rows -= rows % 8                            # sublane-aligned (or == full n below)
    rows = max(rows, 8)
    # TODO(synk): for extremely large D even 8 rows can exceed the scoped-VMEM
    # limit; a D-blocked accumulator pass would be needed there.
    if rows >= n:
        return n                                # tiny input: one tile is fine
    return rows


def _blocks_for_mid_reduce(L, C, T, itemsize, budget):
    """(leading-rows, lane-tile) when the normalized axis C is interior: (L, C, T)."""
    bytes_per_elem = 4 * itemsize + 8
    col_bytes = max(1, C * bytes_per_elem)      # one lane column through the C axis
    if T * col_bytes <= budget:
        tc = T
    else:
        tc = min(T, max(128, ((budget // col_bytes) // 128) * 128))
        # TODO(synk): if C alone is so large that a (1, C, 128) tile exceeds the
        # scoped-VMEM limit, a C-blocked accumulator pass is required.
    bl = max(1, budget // max(1, tc * col_bytes))
    t_steps = pl.cdiv(T, tc)
    want_l_steps = pl.cdiv(_TARGET_STEPS, t_steps)
    floor_bl = max(1, _MIN_TILE_BYTES // max(1, C * tc * itemsize))
    bl = min(bl, max(floor_bl, pl.cdiv(L, want_l_steps)))
    return min(bl, L), tc


def normalize(x, power=2, dim=1, *, block_rows=None, block_lanes=None):
    """L_p-normalize `x` along `dim` (UFSLviaIC `Normalize.forward` semantics)."""
    axis = dim % x.ndim
    shape = x.shape
    L = math.prod(shape[:axis])
    C = shape[axis]
    T = math.prod(shape[axis + 1:])
    itemsize = x.dtype.itemsize
    budget, vmem_limit, vmem_cap = _vmem_budget()

    if T == 1:
        # Normalized axis is already trailing: reduce along the lane axis.
        x2 = x.reshape(L, C)
        rows = block_rows if block_rows is not None else _rows_for_lane_reduce(
            L, C, itemsize, budget)
        block = (rows, C)
        grid = (pl.cdiv(L, rows),)
        in_specs = [pl.BlockSpec(block, lambda i: (i, 0))]
        out_specs = pl.BlockSpec(block, lambda i: (i, 0))
        semantics = ("parallel",)
        # TODO(synk): if C < 128 (non-lane-dense embeddings) the stores are masked
        # partial stores; repacking rows onto lanes would need a transpose.
    else:
        # Interior axis (e.g. NCHW normalize-over-C): merge leading dims into L and
        # trailing dims into T (free contiguous reshapes, no transpose), keep the
        # dense T axis on the lanes and reduce along the middle axis.
        x2 = x.reshape(L, C, T)
        bl, tc = _blocks_for_mid_reduce(L, C, T, itemsize, budget)
        if block_rows is not None:
            bl = block_rows
        if block_lanes is not None:
            tc = block_lanes
        block = (bl, C, tc)
        grid = (pl.cdiv(L, bl), pl.cdiv(T, tc))
        in_specs = [pl.BlockSpec(block, lambda i, j: (i, 0, j))]
        out_specs = pl.BlockSpec(block, lambda i, j: (i, 0, j))
        semantics = ("parallel", "parallel")
        # TODO(synk): if T < 128 the trailing stores are masked (vst.msk); packing
        # several L rows onto the lanes would need a transpose, so it is skipped.

    # If an override / huge-axis floor pushed the tile past the budget, raise the
    # scoped-VMEM limit accordingly (capped at physical capacity).
    tile_bytes = math.prod(block) * itemsize
    vmem_limit = min(max(vmem_limit, 4 * tile_bytes + (4 << 20)), vmem_cap)

    kernel = functools.partial(_normalize_kernel, power=power, axis=1)
    out = pl.pallas_call(
        kernel,
        out_shape=jax.ShapeDtypeStruct(x2.shape, x.dtype),
        grid_spec=pl.GridSpec(grid=grid, in_specs=in_specs, out_specs=out_specs),
        compiler_params=pltpu.CompilerParams(
            dimension_semantics=semantics,
            vmem_limit_bytes=int(vmem_limit),
        ),
    )(x2)
    return out.reshape(shape)


if __name__ == "__main__":
    key = jax.random.PRNGKey(0)
    k1, k2, k3 = jax.random.split(key, 3)

    def ref_normalize(v, p=2, d=1):
        norm = jnp.power(jnp.sum(jnp.power(v, p), axis=d, keepdims=True), 1.0 / p)
        return v / norm

    # 1) 4-D NCHW input, normalize over channels (dim=1): interior-axis path,
    #    no host transposes, lanes stay on the dense H*W axis.
    x4 = jax.random.normal(k1, (2, 4, 16, 16), dtype=jnp.float32)
    out4 = jax.block_until_ready(normalize(x4, power=2, dim=1))
    assert jnp.allclose(out4, ref_normalize(x4), atol=1e-5, rtol=1e-5), "mismatch (NCHW)"

    # 2) 2-D embedding matrix (dim=1 is trailing): lane-reduce path.
    x2 = jax.random.normal(k2, (32, 128), dtype=jnp.float32)
    out2 = jax.block_until_ready(normalize(x2, power=2, dim=1))
    assert jnp.allclose(out2, ref_normalize(x2), atol=1e-5, rtol=1e-5), "mismatch (2D)"

    # 3) Ragged last tile + multi-step grid on the lane-reduce path.
    x3 = jax.random.normal(k3, (24, 128), dtype=jnp.float32)
    out3 = jax.block_until_ready(normalize(x3, power=2, dim=1, block_rows=16))
    assert jnp.allclose(out3, ref_normalize(x3), atol=1e-5, rtol=1e-5), "mismatch (ragged)"

    # 4) Multi-step grid over the leading axis on the interior-axis path.
    out4b = jax.block_until_ready(normalize(x4, power=2, dim=1, block_rows=1))
    assert jnp.allclose(out4b, ref_normalize(x4), atol=1e-5, rtol=1e-5), "mismatch (NCHW tiled)"

    print("KERNEL_OK")
</pallas_src>

<mosaic_0001>
module attributes {stable_mosaic.version = 11 : i64} {
  func.func @_normalize_kernel(%arg0: i32, %arg1: i32, %arg2: memref<2x4x256xf32, #tpu.memory_space<vmem>>, %arg3: memref<2x4x256xf32, #tpu.memory_space<vmem>>) attributes {dimension_semantics = [#tpu.dimension_semantics<parallel>, #tpu.dimension_semantics<parallel>], iteration_bounds = array<i64: 1, 1>, scalar_prefetch = 0 : i64, scratch_operands = 0 : i64, tpu.core_type = #tpu.core_type<tc>, window_params = [{transform_indices = @transform_0, window_bounds = array<i64: 2, 4, 256>}, {transform_indices = @transform_1, window_bounds = array<i64: 2, 4, 256>}]} {
    %c0 = arith.constant 0 : index
    %c0_0 = arith.constant 0 : index
    %c0_1 = arith.constant 0 : index
    %0 = vector.load %arg2[%c0, %c0_0, %c0_1] : memref<2x4x256xf32, #tpu.memory_space<vmem>>, vector<2x4x256xf32>
    %1 = arith.mulf %0, %0 : vector<2x4x256xf32>
    %cst = arith.constant dense<0.000000e+00> : vector<2x256xf32>
    %2 = vector.multi_reduction <add>, %1, %cst [1] : vector<2x4x256xf32> to vector<2x256xf32>
    %3 = vector.shape_cast %2 : vector<2x256xf32> to vector<2x1x256xf32>
    %4 = math.rsqrt %3 : vector<2x1x256xf32>
    %5 = vector.broadcast %4 : vector<2x1x256xf32> to vector<2x4x256xf32>
    %6 = arith.mulf %0, %5 : vector<2x4x256xf32>
    %c0_2 = arith.constant 0 : index
    %c0_3 = arith.constant 0 : index
    %c0_4 = arith.constant 0 : index
    %7 = vector.load %arg3[%c0_2, %c0_3, %c0_4] : memref<2x4x256xf32, #tpu.memory_space<vmem>>, vector<2x4x256xf32>
    tpu.vector_store %arg3[%c0_2, %c0_3, %c0_4], %6 {strides = array<i32>} : memref<2x4x256xf32, #tpu.memory_space<vmem>>, vector<2x4x256xf32>,
    return
  }
  func.func @transform_0(%arg0: i32, %arg1: i32) -> (i32, i32, i32) {
    %c0_i32 = arith.constant 0 : i32
    %c0_i32_0 = arith.constant 0 : i32
    return %arg0, %c0_i32, %arg1 : i32, i32, i32
  }
  func.func @transform_1(%arg0: i32, %arg1: i32) -> (i32, i32, i32) {
    %c0_i32 = arith.constant 0 : i32
    %c0_i32_0 = arith.constant 0 : i32
    return %arg0, %c0_i32, %arg1 : i32, i32, i32
  }
}

</mosaic_0001>

<llo_original>
// kernel: tpu_custom_call.1
$region0: #{tpu_custom_call.1}
  #allocation0 [shape = 'u32[]', space=smem, size = 0x4, offset = 0x4, fixed_abs, tag = 'smem constant byte address 0x4 - core index']
  #allocation1 [shape = 'u32[72,128]{1,0:T(1,128)}', space=vmem, size = 0x9000, scoped, tag = 'internal scratch']
  %s0 = inlined_call_operand.hbm [shape: f32[2,4,256], index: 0, kind: input, shape index: {}]
  %s1 = inlined_call_operand.hbm [shape: f32[2,4,256], index: 1, kind: output, shape index: {}]
  %s2 = sld [smem:[#allocation0]]
  $region18: #{tpu_custom_call.1} parent=0
    _
  %s4 = ssub.s32 1, %s2
  %s5 = scalar_select 0, %s4, %s2
  $region1: #{tpu_custom_call.1} parent=0
    #allocation2 [shape = 'u8[8192]{0}', space=vmem, size = 0x2000, scoped, tag = 'input window, operand 0, single buffered']
    #allocation3 [shape = 's32[1]{0}', space=sflag, size = 0x4, scoped, tag = 'scoped memory for tpu_custom_call.1']
    #allocation4 [shape = 's32[1]{0}', space=sflag, size = 0x4, scoped, tag = 'scoped memory for tpu_custom_call.1']
    #allocation5 [shape = 'u8[8192]{0}', space=vmem, size = 0x2000, scoped, tag = 'output window, operand 0, single buffered']
    %6 = vsyncpa [#allocation3], 0
    %7 = vsyncpa [#allocation4], 0
    // Predicated region
    $region2: #{tpu_custom_call.1} parent=1 // pred_check
      _
    $region3: #{tpu_custom_call.1} parent=1 // pred_check_branch
      %9 = sbr.rel (0) target = $region5
    $region4: #{tpu_custom_call.1} parent=1 // pred_region
      %11 = vsyncadd [#allocation3], 0
      %s12 = sshll.u32 %s0, 4
      %s13 = int_to_ptr.hbm [resolvable:$true] %s12
      %s14 = sshll.u32 [#allocation2], 4
      %s15 = int_to_ptr.vmem [resolvable:$true] %s14
      %20 = dma.hbm_to_vmem [thread:$0]  %s13, 256, %s15, [#allocation3], 128, 128, 8
    $region5: #{tpu_custom_call.1} parent=1 // pred_fallthru
      _
    // Predicated region
    $region6: #{tpu_custom_call.1} parent=1 // pred_check
      _
    $region7: #{tpu_custom_call.1} parent=1 // pred_check_branch
      %22 = sbr.rel (0) target = $region9
    $region8: #{tpu_custom_call.1} parent=1 // pred_region
      %24 = dma.done [#allocation3], 256
    $region9: #{tpu_custom_call.1} parent=1 // pred_fallthru
      _
    %v25 = vld [vmem:[#allocation2] sm:$0xff]
    %v26 = vld [vmem:[#allocation2 + $0x8] sm:$0xff]
    %v27 = vmul.f32 %v25, %v25
    %v28 = vmul.f32 %v26, %v26
    %31 = vst [vmem:[#allocation1] ss:$2 sm:$0xff] %v27
    %v32 = vld.sshfl [vmem:[#allocation1] sm:$0xff pattern:$0x75316420]
    %v33 = vld.sshfl [vmem:[#allocation1 + $0x8] sm:$0xff pattern:$0x75316420]
    %s34 = scalar_lea.vmem [#allocation1], 16
    %35 = vst [vmem:[%s34] ss:$2 sm:$0xff] %v28
    %v36 = vld.sshfl [vmem:[#allocation1 + $0x10] sm:$0xff pattern:$0x75316420]
    %v37 = vld.sshfl [vmem:[#allocation1 + $0x18] sm:$0xff pattern:$0x75316420]
    %vm42 = vcmask 1043456
    %v43 = vsel %vm42, %v32, 0.0
    %v44 = vrot.slane %v43, 4
    %v45 = vadd.f32 %v43, %v44
    %v46 = vrot.slane %v45, 2
    %v47 = vadd.f32 %v45, %v46
    %v48 = vrot.slane %v47, 1
    %v49 = vadd.f32 %v47, %v48
    %v50 = vsel %vm42, %v33, 0.0
    %v51 = vrot.slane %v50, 4
    %v52 = vadd.f32 %v50, %v51
    %v53 = vrot.slane %v52, 2
    %v54 = vadd.f32 %v52, %v53
    %v55 = vrot.slane %v54, 1
    %v56 = vadd.f32 %v54, %v55
    %v57 = vsel %vm42, %v36, 0.0
    %v58 = vrot.slane %v57, 4
    %v59 = vadd.f32 %v57, %v58
    %v60 = vrot.slane %v59, 2
    %v61 = vadd.f32 %v59, %v60
    %v62 = vrot.slane %v61, 1
    %v63 = vadd.f32 %v61, %v62
    %v64 = vsel %vm42, %v37, 0.0
    %v65 = vrot.slane %v64, 4
    %v66 = vadd.f32 %v64, %v65
    %v67 = vrot.slane %v66, 2
    %v68 = vadd.f32 %v66, %v67
    %v69 = vrot.slane %v68, 1
    %v70 = vadd.f32 %v68, %v69
    %v71 = vrsqrt.pop %v49
    %v72 = vmul.f32 %v71, %v49
    %v73 = vmul.f32 %v72, %v71
    %v74 = vmul.f32 0.5, %v73
    %v75 = vsub.f32 1.5, %v74
    %v76 = vmul.f32 %v71, %v75
    %vm77 = vweird.f32 %v49
    %vm78 = vweird.f32 %v71
    %vm79 = vmor %vm77, %vm78
    %v80 = vsel %vm79, %v71, %v76
    %v81 = vrsqrt.pop %v56
    %v82 = vmul.f32 %v81, %v56
    %v83 = vmul.f32 %v82, %v81
    %v84 = vmul.f32 0.5, %v83
    %v85 = vsub.f32 1.5, %v84
    %v86 = vmul.f32 %v81, %v85
    %vm87 = vweird.f32 %v56
    %vm88 = vweird.f32 %v81
    %vm89 = vmor %vm87, %vm88
    %v90 = vsel %vm89, %v81, %v86
    %v91 = vrsqrt.pop %v63
    %v92 = vmul.f32 %v91, %v63
    %v93 = vmul.f32 %v92, %v91
    %v94 = vmul.f32 0.5, %v93
    %v95 = vsub.f32 1.5, %v94
    %v96 = vmul.f32 %v91, %v95
    %vm97 = vweird.f32 %v63
    %vm98 = vweird.f32 %v91
    %vm99 = vmor %vm97, %vm98
    %v100 = vsel %vm99, %v91, %v96
    %v101 = vrsqrt.pop %v70
    %v102 = vmul.f32 %v101, %v70
    %v103 = vmul.f32 %v102, %v101
    %v104 = vmul.f32 0.5, %v103
    %v105 = vsub.f32 1.5, %v104
    %v106 = vmul.f32 %v101, %v105
    %vm107 = vweird.f32 %v70
    %vm108 = vweird.f32 %v101
    %vm109 = vmor %vm107, %vm108
    %v110 = vsel %vm109, %v101, %v106
    %v115 = vrot.slane %v90, 4
    %v116 = vrot.slane %v110, 4
    %v117 = vsel %vm42, %v80, %v115
    %v118 = vsel %vm42, %v100, %v116
    %v121 = vmul.f32 %v25, %v117
    %v122 = vmul.f32 %v26, %v118
    %123 = vst [vmem:[#allocation5] sm:$0xff] %v121
    %124 = vst [vmem:[#allocation5 + $0x8] sm:$0xff] %v122
    // Predicated region
    $region10: #{tpu_custom_call.1} parent=1 // pred_check
      _
    $region11: #{tpu_custom_call.1} parent=1 // pred_check_branch
      %126 = sbr.rel (0) target = $region13
    $region12: #{tpu_custom_call.1} parent=1 // pred_region
      %128 = vsyncadd [#allocation4], 0
      %s129 = sshll.u32 [#allocation5], 4
      %s130 = int_to_ptr.vmem [resolvable:$true] %s129
      %s131 = sshll.u32 %s1, 4
      %s132 = int_to_ptr.hbm [resolvable:$true] %s131
      %137 = dma.vmem_to_hbm [thread:$0]  %s130, 256, %s132, [#allocation4], 128, 128, 8
    $region13: #{tpu_custom_call.1} parent=1 // pred_fallthru
      _
    // Predicated region
    $region14: #{tpu_custom_call.1} parent=1 // pred_check
      _
    $region15: #{tpu_custom_call.1} parent=1 // pred_check_branch
      %139 = sbr.rel (0) target = $region17
    $region16: #{tpu_custom_call.1} parent=1 // pred_region
      %141 = dma.done [#allocation4], 256
    $region17: #{tpu_custom_call.1} parent=1 // pred_fallthru
      _
    %142 = vsyncpa [#allocation3], 1
    %143 = vsyncpa [#allocation4], 1

</llo_original>
